<compile_context>
chip_gen: v6e
topology: v6e:2x2x1
jax: 0.10.0
libtpu: 0.0.40
codegen_flags: <defaults>
</compile_context>

<pallas_src>
import math
import functools

import jax
import jax.numpy as jnp
from jax.experimental import pallas as pl
from jax.experimental.pallas import tpu as pltpu


def _round_up(v, m):
    return (v + m - 1) // m * m


def _nce_kernel(x_ref, mem_ref, idx_t_ref, out_ref, acc_ref, *, kp, inv_t, tos):
    """Grid step = (batch tile bt, bank tile ot).

    x_ref     : (TM, Dp)   bf16  batch tile (constant across ot)
    mem_ref   : (TOS, Dp)  bf16  current memory-bank tile
    idx_t_ref : (Kp, TM)   i32   transposed sample indices (constant across ot)
    out_ref   : (Kp, TM)   f32   transposed exp(scores / T), lane-dense
    acc_ref   : (Kp, TM)   f32   VMEM scratch accumulator over bank tiles
    """
    ot = pl.program_id(1)

    @pl.when(ot == 0)
    def _init():
        acc_ref[...] = jnp.zeros_like(acc_ref)

    # One MXU matmul per bank tile: S[o, b] = <memory[o], x[b]>,
    # bf16 operands / f32 accumulation.
    s_t = jax.lax.dot_general(
        mem_ref[...], x_ref[...],
        dimension_numbers=(((1,), (1,)), ((), ())),
        preferred_element_type=jnp.float32)                      # (TOS, TM) f32

    idx_t = idx_t_ref[...]                                       # (Kp, TM)
    row_ids = ot * tos + jax.lax.broadcasted_iota(jnp.int32, s_t.shape, 0)

    # Select the Kp requested scores per batch row (mask + sublane reduce) and
    # accumulate them directly into the scratch rows (no concatenate of 1-row
    # slabs).  Kp is small & static -> unrolled VPU/XLU filler that co-issues
    # under the next bank tile's DMA/MXU work.
    # TODO(synk): replace with the DMA-gather of the K+1 selected rows for
    # dataset-sized banks (see module header).
    for k in range(kp):
        mask = row_ids == idx_t[k:k + 1, :]
        acc_ref[k:k + 1, :] += jnp.sum(jnp.where(mask, s_t, 0.0),
                                       axis=0, keepdims=True)

    @pl.when(ot == pl.num_programs(1) - 1)
    def _finalize():
        # Full-tile exp (EUP) + single lane-dense (128-wide) store.
        out_ref[...] = jnp.exp(acc_ref[...] * inv_t)


def nce_exp_scores(x, memory, idx, T):
    """Pallas kernel: exp(<memory[idx[b,k]], x[b]> / T), shape (B, K+1).

    NOTE: exp(score/T) with T=0.07 matches the PyTorch semantics exactly and
    assumes (as the original NCE usage does) L2-normalized features / bank
    rows; un-normalized inputs can overflow f32, same as the reference module.
    """
    B, D = x.shape
    out_size, D2 = memory.shape
    assert D == D2
    k_plus_1 = idx.shape[1]

    # --- tiling / padding ----------------------------------------------------
    TM = 128                       # lane-dense transposed output blocks
    # TODO(synk): on v7x (2 TensorCores) with B <= 128, TM=64 would give a
    # 2-tile "parallel" batch axis at the cost of half-width (masked) stores.
    Dp = _round_up(D, 128)
    Kp = _round_up(k_plus_1, 8)
    B_pad = _round_up(B, TM)
    TOS = min(512, _round_up(out_size, 8))     # bank tile (sublane multiple)
    OS_pad = _round_up(out_size, TOS)

    # bf16 matmul operands (f32 accumulation inside the kernel).  Zero padding
    # keeps the dot products exact; padded bank rows (index >= out_size) are
    # never selected by any idx; padded batch rows / K columns are sliced off.
    x_p = jnp.zeros((B_pad, Dp), jnp.bfloat16).at[:B, :D].set(
        x.astype(jnp.bfloat16))
    mem_p = jnp.zeros((OS_pad, Dp), jnp.bfloat16).at[:out_size, :D].set(
        memory.astype(jnp.bfloat16))
    idx_p = jnp.zeros((B_pad, Kp), jnp.int32).at[:B, :k_plus_1].set(
        idx.astype(jnp.int32))
    idx_t = idx_p.T                                            # (Kp, B_pad)

    n_bt = B_pad // TM
    n_os = OS_pad // TOS

    kernel = functools.partial(_nce_kernel, kp=Kp, inv_t=float(1.0 / T),
                               tos=TOS)

    # --- per-generation VMEM budget ------------------------------------------
    try:
        cap = int(getattr(pltpu.get_tpu_info(), "vmem_capacity_bytes",
                          128 << 20))
    except Exception:  # conservative fallback valid on v5e/v6e/v7x
        cap = 64 << 20
    resident = (2 * TM * Dp * 2            # x tile, double-buffered, bf16
                + 2 * TOS * Dp * 2         # bank tile, double-buffered, bf16
                + 4 * Kp * TM * 4          # idx_t + out blocks
                + Kp * TM * 4              # accumulator scratch
                + 4 * TOS * TM * 4         # score slab + mask temporaries
                + (2 << 20))               # headroom
    vmem_bytes = int(min(max(resident, 16 << 20), int(0.85 * cap)))

    out_t = pl.pallas_call(
        kernel,
        out_shape=jax.ShapeDtypeStruct((Kp, B_pad), jnp.float32),
        grid=(n_bt, n_os),
        in_specs=[
            pl.BlockSpec((TM, Dp), lambda bt, ot: (bt, 0)),    # x batch tile
            pl.BlockSpec((TOS, Dp), lambda bt, ot: (ot, 0)),   # bank tile
            pl.BlockSpec((Kp, TM), lambda bt, ot: (0, bt)),    # idx^T tile
        ],
        out_specs=pl.BlockSpec((Kp, TM), lambda bt, ot: (0, bt)),
        scratch_shapes=[pltpu.VMEM((Kp, TM), jnp.float32)],
        compiler_params=pltpu.CompilerParams(
            dimension_semantics=("parallel", "arbitrary"),
            vmem_limit_bytes=vmem_bytes),
    )(x_p, mem_p, idx_t)

    return out_t[:k_plus_1, :B].T                              # (B, K+1)


class NCEAverageJax:
    """JAX/Pallas equivalent of the PyTorch NCEAverage module (forward only)."""

    def __init__(self, inputSize, outputSize, K, T=0.07, momentum=0.5, seed=0):
        self.K = K
        self.T = float(T)
        self.inputSize = inputSize
        self.outputSize = outputSize
        # params buffer: [K, T, Z(=-1 -> uninitialized), momentum]
        self.params = jnp.array([K, T, -1.0, momentum], dtype=jnp.float32)
        # memory buffer: uniform in [-stdv, stdv], stdv = 1/sqrt(inputSize/3)
        stdv = 1.0 / math.sqrt(inputSize / 3)
        self.memory = jax.random.uniform(
            jax.random.PRNGKey(seed), (outputSize, inputSize),
            minval=-stdv, maxval=stdv, dtype=jnp.float32)
        self._last_idx = None

    def forward(self, x, y, idx_key):
        B = x.shape[0]
        # AliasMethod over uniform unigrams == uniform sampling on [0, outputSize)
        idx = jax.random.randint(idx_key, (B, self.K + 1), 0, self.outputSize,
                                 dtype=jnp.int32)
        idx = idx.at[:, 0].set(y.astype(jnp.int32))    # idx.select(1,0).copy_(y)
        self._last_idx = idx

        # Hot path (bank scores + idx-select + exp/T) runs in the Pallas kernel.
        exp_out = nce_exp_scores(x, self.memory, idx, self.T)

        # First-call Z estimation is a data-dependent scalar reduction over the
        # kernel output; kept in plain JAX (glue), mirroring params[2] update.
        z_cur = self.params[2]
        Z = jnp.where(z_cur < 0, jnp.mean(exp_out) * self.outputSize, z_cur)
        self.params = self.params.at[2].set(Z)
        # TODO(synk): backward / momentum memory.index_copy_ update not ported
        # (forward-only scope).
        return exp_out / Z


if __name__ == "__main__":
    # Small shapes: B=8 features of dim 128, memory bank of 64 entries, K=7.
    B, inputSize, outputSize, K = 8, 128, 64, 7

    key = jax.random.PRNGKey(0)
    kx, ky, kidx = jax.random.split(key, 3)

    x = jax.random.normal(kx, (B, inputSize), dtype=jnp.float32)
    x = x / jnp.linalg.norm(x, axis=1, keepdims=True)   # NCE features L2-normalized
    y = jax.random.randint(ky, (B,), 0, outputSize, dtype=jnp.int32)

    model = NCEAverageJax(inputSize, outputSize, K, T=0.07, momentum=0.5, seed=0)
    out = model.forward(x, y, kidx)
    out = jax.block_until_ready(out)
    assert out.shape == (B, K + 1), out.shape

    # Plain-JAX reference with the SAME bf16 operand rounding as the MXU path
    # (scores/exp/Z in f32), so the tolerance check reflects kernel numerics.
    x_bf = x.astype(jnp.bfloat16).astype(jnp.float32)
    mem_bf = model.memory.astype(jnp.bfloat16).astype(jnp.float32)
    w_ref = mem_bf[model._last_idx]                     # (B, K+1, D)
    scores_ref = jnp.einsum("bkd,bd->bk", w_ref, x_bf)
    exp_ref = jnp.exp(scores_ref / model.T)
    Z_ref = jnp.mean(exp_ref) * outputSize
    out_ref = exp_ref / Z_ref
    assert jnp.allclose(out, out_ref, rtol=1e-3, atol=1e-6), (
        float(jnp.max(jnp.abs(out - out_ref))))

    print("KERNEL_OK")
</pallas_src>

<mosaic_0001>
module attributes {stable_mosaic.version = 11 : i64} {
  func.func @_nce_kernel(%arg0: i32, %arg1: i32, %arg2: memref<128x128xbf16, #tpu.memory_space<vmem>>, %arg3: memref<64x128xbf16, #tpu.memory_space<vmem>>, %arg4: memref<8x128xi32, #tpu.memory_space<vmem>>, %arg5: memref<8x128xf32, #tpu.memory_space<vmem>>, %arg6: memref<8x128xf32, #tpu.memory_space<vmem>>) attributes {dimension_semantics = [#tpu.dimension_semantics<parallel>, #tpu.dimension_semantics<arbitrary>], iteration_bounds = array<i64: 1, 1>, scalar_prefetch = 0 : i64, scratch_operands = 1 : i64, tpu.core_type = #tpu.core_type<tc>, window_params = [{transform_indices = @transform_0, window_bounds = array<i64: 128, 128>}, {transform_indices = @transform_1, window_bounds = array<i64: 64, 128>}, {transform_indices = @transform_2, window_bounds = array<i64: 8, 128>}, {transform_indices = @transform_3, window_bounds = array<i64: 8, 128>}]} {
    %c0_i32 = arith.constant 0 : i32
    %0 = arith.cmpi eq, %arg1, %c0_i32 : i32
    %1 = arith.extui %0 : i1 to i32
    %c0_i32_0 = arith.constant 0 : i32
    %2 = arith.cmpi ne, %1, %c0_i32_0 : i32
    scf.if %2 {
      %cst_49 = arith.constant 0.000000e+00 : f32
      %94 = vector.broadcast %cst_49 : f32 to vector<8x128xf32>
      %c0_50 = arith.constant 0 : index
      %c0_51 = arith.constant 0 : index
      %95 = vector.load %arg6[%c0_50, %c0_51] : memref<8x128xf32, #tpu.memory_space<vmem>>, vector<8x128xf32>
      tpu.vector_store %arg6[%c0_50, %c0_51], %94 {strides = array<i32>} : memref<8x128xf32, #tpu.memory_space<vmem>>, vector<8x128xf32>,
    } else {
    }
    %c0 = arith.constant 0 : index
    %c0_1 = arith.constant 0 : index
    %3 = vector.load %arg3[%c0, %c0_1] : memref<64x128xbf16, #tpu.memory_space<vmem>>, vector<64x128xbf16>
    %c0_2 = arith.constant 0 : index
    %c0_3 = arith.constant 0 : index
    %4 = vector.load %arg2[%c0_2, %c0_3] : memref<128x128xbf16, #tpu.memory_space<vmem>>, vector<128x128xbf16>
    %cst = arith.constant dense<0.000000e+00> : vector<64x128xf32>
    %5 = tpu.matmul %3, %4, %cst {dimension_numbers = #tpu.dot_dimension_numbers<[1], [1], [0], [0], [0, 0, 1, 0], [], []>} : vector<64x128xbf16>, vector<128x128xbf16>, vector<64x128xf32> -> vector<64x128xf32>
    %c0_4 = arith.constant 0 : index
    %c0_5 = arith.constant 0 : index
    %6 = vector.load %arg4[%c0_4, %c0_5] : memref<8x128xi32, #tpu.memory_space<vmem>>, vector<8x128xi32>
    %c64_i32 = arith.constant 64 : i32
    %7 = arith.muli %arg1, %c64_i32 : i32
    %8 = tpu.iota {dimensions = array<i32: 0>} : vector<64x128xi32>
    %9 = vector.broadcast %7 : i32 to vector<64x128xi32>
    %10 = arith.addi %9, %8 : vector<64x128xi32>
    %11 = vector.extract_strided_slice %6 {offsets = [0, 0], sizes = [1, 128], strides = [1, 1]} : vector<8x128xi32> to vector<1x128xi32>
    %12 = vector.broadcast %11 : vector<1x128xi32> to vector<64x128xi32>
    %13 = arith.cmpi eq, %10, %12 : vector<64x128xi32>
    %c0_6 = arith.constant 0 : index
    %c0_7 = arith.constant 0 : index
    %14 = vector.load %arg6[%c0_6, %c0_7] : memref<8x128xf32, #tpu.memory_space<vmem>>, vector<1x128xf32>
    %cst_8 = arith.constant 0.000000e+00 : f32
    %15 = vector.broadcast %cst_8 : f32 to vector<64x128xf32>
    %16 = arith.select %13, %5, %15 : vector<64x128xi1>, vector<64x128xf32>
    %cst_9 = arith.constant dense<0.000000e+00> : vector<128xf32>
    %17 = vector.multi_reduction <add>, %16, %cst_9 [0] : vector<64x128xf32> to vector<128xf32>
    %18 = vector.shape_cast %17 : vector<128xf32> to vector<1x128xf32>
    %19 = arith.addf %14, %18 : vector<1x128xf32>
    %c0_10 = arith.constant 0 : index
    %c0_11 = arith.constant 0 : index
    %20 = vector.load %arg6[%c0_10, %c0_11] : memref<8x128xf32, #tpu.memory_space<vmem>>, vector<1x128xf32>
    tpu.vector_store %arg6[%c0_10, %c0_11], %19 {strides = array<i32>} : memref<8x128xf32, #tpu.memory_space<vmem>>, vector<1x128xf32>,
    %21 = vector.extract_strided_slice %6 {offsets = [1, 0], sizes = [1, 128], strides = [1, 1]} : vector<8x128xi32> to vector<1x128xi32>
    %22 = vector.broadcast %21 : vector<1x128xi32> to vector<64x128xi32>
    %23 = arith.cmpi eq, %10, %22 : vector<64x128xi32>
    %c1 = arith.constant 1 : index
    %c0_12 = arith.constant 0 : index
    %24 = vector.load %arg6[%c1, %c0_12] : memref<8x128xf32, #tpu.memory_space<vmem>>, vector<1x128xf32>
    %cst_13 = arith.constant 0.000000e+00 : f32
    %25 = vector.broadcast %cst_13 : f32 to vector<64x128xf32>
    %26 = arith.select %23, %5, %25 : vector<64x128xi1>, vector<64x128xf32>
    %cst_14 = arith.constant dense<0.000000e+00> : vector<128xf32>
    %27 = vector.multi_reduction <add>, %26, %cst_14 [0] : vector<64x128xf32> to vector<128xf32>
    %28 = vector.shape_cast %27 : vector<128xf32> to vector<1x128xf32>
    %29 = arith.addf %24, %28 : vector<1x128xf32>
    %c1_15 = arith.constant 1 : index
    %c0_16 = arith.constant 0 : index
    %30 = vector.load %arg6[%c1_15, %c0_16] : memref<8x128xf32, #tpu.memory_space<vmem>>, vector<1x128xf32>
    tpu.vector_store %arg6[%c1_15, %c0_16], %29 {strides = array<i32>} : memref<8x128xf32, #tpu.memory_space<vmem>>, vector<1x128xf32>,
    %31 = vector.extract_strided_slice %6 {offsets = [2, 0], sizes = [1, 128], strides = [1, 1]} : vector<8x128xi32> to vector<1x128xi32>
    %32 = vector.broadcast %31 : vector<1x128xi32> to vector<64x128xi32>
    %33 = arith.cmpi eq, %10, %32 : vector<64x128xi32>
    %c2 = arith.constant 2 : index
    %c0_17 = arith.constant 0 : index
    %34 = vector.load %arg6[%c2, %c0_17] : memref<8x128xf32, #tpu.memory_space<vmem>>, vector<1x128xf32>
    %cst_18 = arith.constant 0.000000e+00 : f32
    %35 = vector.broadcast %cst_18 : f32 to vector<64x128xf32>
    %36 = arith.select %33, %5, %35 : vector<64x128xi1>, vector<64x128xf32>
    %cst_19 = arith.constant dense<0.000000e+00> : vector<128xf32>
    %37 = vector.multi_reduction <add>, %36, %cst_19 [0] : vector<64x128xf32> to vector<128xf32>
    %38 = vector.shape_cast %37 : vector<128xf32> to vector<1x128xf32>
    %39 = arith.addf %34, %38 : vector<1x128xf32>
    %c2_20 = arith.constant 2 : index
    %c0_21 = arith.constant 0 : index
    %40 = vector.load %arg6[%c2_20, %c0_21] : memref<8x128xf32, #tpu.memory_space<vmem>>, vector<1x128xf32>
    tpu.vector_store %arg6[%c2_20, %c0_21], %39 {strides = array<i32>} : memref<8x128xf32, #tpu.memory_space<vmem>>, vector<1x128xf32>,
    %41 = vector.extract_strided_slice %6 {offsets = [3, 0], sizes = [1, 128], strides = [1, 1]} : vector<8x128xi32> to vector<1x128xi32>
    %42 = vector.broadcast %41 : vector<1x128xi32> to vector<64x128xi32>
    %43 = arith.cmpi eq, %10, %42 : vector<64x128xi32>
    %c3 = arith.constant 3 : index
    %c0_22 = arith.constant 0 : index
    %44 = vector.load %arg6[%c3, %c0_22] : memref<8x128xf32, #tpu.memory_space<vmem>>, vector<1x128xf32>
    %cst_23 = arith.constant 0.000000e+00 : f32
    %45 = vector.broadcast %cst_23 : f32 to vector<64x128xf32>
    %46 = arith.select %43, %5, %45 : vector<64x128xi1>, vector<64x128xf32>
    %cst_24 = arith.constant dense<0.000000e+00> : vector<128xf32>
    %47 = vector.multi_reduction <add>, %46, %cst_24 [0] : vector<64x128xf32> to vector<128xf32>
    %48 = vector.shape_cast %47 : vector<128xf32> to vector<1x128xf32>
    %49 = arith.addf %44, %48 : vector<1x128xf32>
    %c3_25 = arith.constant 3 : index
    %c0_26 = arith.constant 0 : index
    %50 = vector.load %arg6[%c3_25, %c0_26] : memref<8x128xf32, #tpu.memory_space<vmem>>, vector<1x128xf32>
    tpu.vector_store %arg6[%c3_25, %c0_26], %49 {strides = array<i32>} : memref<8x128xf32, #tpu.memory_space<vmem>>, vector<1x128xf32>,
    %51 = vector.extract_strided_slice %6 {offsets = [4, 0], sizes = [1, 128], strides = [1, 1]} : vector<8x128xi32> to vector<1x128xi32>
    %52 = vector.broadcast %51 : vector<1x128xi32> to vector<64x128xi32>
    %53 = arith.cmpi eq, %10, %52 : vector<64x128xi32>
    %c4 = arith.constant 4 : index
    %c0_27 = arith.constant 0 : index
    %54 = vector.load %arg6[%c4, %c0_27] : memref<8x128xf32, #tpu.memory_space<vmem>>, vector<1x128xf32>
    %cst_28 = arith.constant 0.000000e+00 : f32
    %55 = vector.broadcast %cst_28 : f32 to vector<64x128xf32>
    %56 = arith.select %53, %5, %55 : vector<64x128xi1>, vector<64x128xf32>
    %cst_29 = arith.constant dense<0.000000e+00> : vector<128xf32>
    %57 = vector.multi_reduction <add>, %56, %cst_29 [0] : vector<64x128xf32> to vector<128xf32>
    %58 = vector.shape_cast %57 : vector<128xf32> to vector<1x128xf32>
    %59 = arith.addf %54, %58 : vector<1x128xf32>
    %c4_30 = arith.constant 4 : index
    %c0_31 = arith.constant 0 : index
    %60 = vector.load %arg6[%c4_30, %c0_31] : memref<8x128xf32, #tpu.memory_space<vmem>>, vector<1x128xf32>
    tpu.vector_store %arg6[%c4_30, %c0_31], %59 {strides = array<i32>} : memref<8x128xf32, #tpu.memory_space<vmem>>, vector<1x128xf32>,
    %61 = vector.extract_strided_slice %6 {offsets = [5, 0], sizes = [1, 128], strides = [1, 1]} : vector<8x128xi32> to vector<1x128xi32>
    %62 = vector.broadcast %61 : vector<1x128xi32> to vector<64x128xi32>
    %63 = arith.cmpi eq, %10, %62 : vector<64x128xi32>
    %c5 = arith.constant 5 : index
    %c0_32 = arith.constant 0 : index
    %64 = vector.load %arg6[%c5, %c0_32] : memref<8x128xf32, #tpu.memory_space<vmem>>, vector<1x128xf32>
    %cst_33 = arith.constant 0.000000e+00 : f32
    %65 = vector.broadcast %cst_33 : f32 to vector<64x128xf32>
    %66 = arith.select %63, %5, %65 : vector<64x128xi1>, vector<64x128xf32>
    %cst_34 = arith.constant dense<0.000000e+00> : vector<128xf32>
    %67 = vector.multi_reduction <add>, %66, %cst_34 [0] : vector<64x128xf32> to vector<128xf32>
    %68 = vector.shape_cast %67 : vector<128xf32> to vector<1x128xf32>
    %69 = arith.addf %64, %68 : vector<1x128xf32>
    %c5_35 = arith.constant 5 : index
    %c0_36 = arith.constant 0 : index
    %70 = vector.load %arg6[%c5_35, %c0_36] : memref<8x128xf32, #tpu.memory_space<vmem>>, vector<1x128xf32>
    tpu.vector_store %arg6[%c5_35, %c0_36], %69 {strides = array<i32>} : memref<8x128xf32, #tpu.memory_space<vmem>>, vector<1x128xf32>,
    %71 = vector.extract_strided_slice %6 {offsets = [6, 0], sizes = [1, 128], strides = [1, 1]} : vector<8x128xi32> to vector<1x128xi32>
    %72 = vector.broadcast %71 : vector<1x128xi32> to vector<64x128xi32>
    %73 = arith.cmpi eq, %10, %72 : vector<64x128xi32>
    %c6 = arith.constant 6 : index
    %c0_37 = arith.constant 0 : index
    %74 = vector.load %arg6[%c6, %c0_37] : memref<8x128xf32, #tpu.memory_space<vmem>>, vector<1x128xf32>
    %cst_38 = arith.constant 0.000000e+00 : f32
    %75 = vector.broadcast %cst_38 : f32 to vector<64x128xf32>
    %76 = arith.select %73, %5, %75 : vector<64x128xi1>, vector<64x128xf32>
    %cst_39 = arith.constant dense<0.000000e+00> : vector<128xf32>
    %77 = vector.multi_reduction <add>, %76, %cst_39 [0] : vector<64x128xf32> to vector<128xf32>
    %78 = vector.shape_cast %77 : vector<128xf32> to vector<1x128xf32>
    %79 = arith.addf %74, %78 : vector<1x128xf32>
    %c6_40 = arith.constant 6 : index
    %c0_41 = arith.constant 0 : index
    %80 = vector.load %arg6[%c6_40, %c0_41] : memref<8x128xf32, #tpu.memory_space<vmem>>, vector<1x128xf32>
    tpu.vector_store %arg6[%c6_40, %c0_41], %79 {strides = array<i32>} : memref<8x128xf32, #tpu.memory_space<vmem>>, vector<1x128xf32>,
    %81 = vector.extract_strided_slice %6 {offsets = [7, 0], sizes = [1, 128], strides = [1, 1]} : vector<8x128xi32> to vector<1x128xi32>
    %82 = vector.broadcast %81 : vector<1x128xi32> to vector<64x128xi32>
    %83 = arith.cmpi eq, %10, %82 : vector<64x128xi32>
    %c7 = arith.constant 7 : index
    %c0_42 = arith.constant 0 : index
    %84 = vector.load %arg6[%c7, %c0_42] : memref<8x128xf32, #tpu.memory_space<vmem>>, vector<1x128xf32>
    %cst_43 = arith.constant 0.000000e+00 : f32
    %85 = vector.broadcast %cst_43 : f32 to vector<64x128xf32>
    %86 = arith.select %83, %5, %85 : vector<64x128xi1>, vector<64x128xf32>
    %cst_44 = arith.constant dense<0.000000e+00> : vector<128xf32>
    %87 = vector.multi_reduction <add>, %86, %cst_44 [0] : vector<64x128xf32> to vector<128xf32>
    %88 = vector.shape_cast %87 : vector<128xf32> to vector<1x128xf32>
    %89 = arith.addf %84, %88 : vector<1x128xf32>
    %c7_45 = arith.constant 7 : index
    %c0_46 = arith.constant 0 : index
    %90 = vector.load %arg6[%c7_45, %c0_46] : memref<8x128xf32, #tpu.memory_space<vmem>>, vector<1x128xf32>
    tpu.vector_store %arg6[%c7_45, %c0_46], %89 {strides = array<i32>} : memref<8x128xf32, #tpu.memory_space<vmem>>, vector<1x128xf32>,
    %c0_i32_47 = arith.constant 0 : i32
    %91 = arith.cmpi eq, %arg1, %c0_i32_47 : i32
    %92 = arith.extui %91 : i1 to i32
    %c0_i32_48 = arith.constant 0 : i32
    %93 = arith.cmpi ne, %92, %c0_i32_48 : i32
    scf.if %93 {
      %c0_49 = arith.constant 0 : index
      %c0_50 = arith.constant 0 : index
      %94 = vector.load %arg6[%c0_49, %c0_50] : memref<8x128xf32, #tpu.memory_space<vmem>>, vector<8x128xf32>
      %cst_51 = arith.constant 14.2857141 : f32
      %95 = vector.broadcast %cst_51 : f32 to vector<8x128xf32>
      %96 = arith.mulf %94, %95 : vector<8x128xf32>
      %97 = math.exp %96 : vector<8x128xf32>
      %c0_52 = arith.constant 0 : index
      %c0_53 = arith.constant 0 : index
      %98 = vector.load %arg5[%c0_52, %c0_53] : memref<8x128xf32, #tpu.memory_space<vmem>>, vector<8x128xf32>
      tpu.vector_store %arg5[%c0_52, %c0_53], %97 {strides = array<i32>} : memref<8x128xf32, #tpu.memory_space<vmem>>, vector<8x128xf32>,
    } else {
    }
    return
  }
  func.func @transform_0(%arg0: i32, %arg1: i32) -> (i32, i32) {
    %c0_i32 = arith.constant 0 : i32
    %c0_i32_0 = arith.constant 0 : i32
    return %arg0, %c0_i32 : i32, i32
  }
  func.func @transform_1(%arg0: i32, %arg1: i32) -> (i32, i32) {
    %c0_i32 = arith.constant 0 : i32
    %c0_i32_0 = arith.constant 0 : i32
    return %arg1, %c0_i32 : i32, i32
  }
  func.func @transform_2(%arg0: i32, %arg1: i32) -> (i32, i32) {
    %c0_i32 = arith.constant 0 : i32
    %c0_i32_0 = arith.constant 0 : i32
    return %c0_i32, %arg0 : i32, i32
  }
  func.func @transform_3(%arg0: i32, %arg1: i32) -> (i32, i32) {
    %c0_i32 = arith.constant 0 : i32
    %c0_i32_0 = arith.constant 0 : i32
    return %c0_i32, %arg0 : i32, i32
  }
}

</mosaic_0001>

<llo_original>
// kernel: tpu_custom_call.1
$region0: #{tpu_custom_call.1}
  #allocation0 [shape = 'u32[]', space=smem, size = 0x4, offset = 0x4, fixed_abs, tag = 'smem constant byte address 0x4 - core index']
  #allocation1 [shape = 'u32[144,128]{1,0:T(1,128)}', space=vmem, size = 0x12000, scoped, tag = 'internal scratch']
  #allocation2 [shape = 'f32[8,128]{1,0:T(8,128)}', space=vmem, size = 0x1000, scoped, tag = 'scratch operand']
  %s0 = inlined_call_operand.hbm [shape: bf16[128,128], index: 0, kind: input, shape index: {}]
  %s1 = inlined_call_operand.hbm [shape: bf16[64,128], index: 1, kind: input, shape index: {}]
  %s2 = inlined_call_operand.hbm [shape: s32[8,128], index: 2, kind: input, shape index: {}]
  %s3 = inlined_call_operand.hbm [shape: f32[8,128], index: 3, kind: output, shape index: {}]
  %s4 = sld [smem:[#allocation0]]
  $region42: #{tpu_custom_call.1} parent=0
    _
  %s6 = ssub.s32 1, %s4
  %s7 = scalar_select 0, %s6, %s4
  $region1: #{tpu_custom_call.1} parent=0
    #allocation3 [shape = 'u8[32768]{0}', space=vmem, size = 0x8000, scoped, tag = 'input window, operand 0, single buffered']
    #allocation4 [shape = 's32[1]{0}', space=sflag, size = 0x4, scoped, tag = 'scoped memory for tpu_custom_call.1']
    #allocation5 [shape = 's32[1]{0}', space=sflag, size = 0x4, scoped, tag = 'scoped memory for tpu_custom_call.1']
    #allocation6 [shape = 'u8[16384]{0}', space=vmem, size = 0x4000, scoped, tag = 'input window, operand 1, single buffered']
    #allocation7 [shape = 's32[1]{0}', space=sflag, size = 0x4, scoped, tag = 'scoped memory for tpu_custom_call.1']
    #allocation8 [shape = 'u8[4096]{0}', space=vmem, size = 0x1000, scoped, tag = 'input window, operand 2, single buffered']
    #allocation9 [shape = 'u8[4096]{0}', space=vmem, size = 0x1000, scoped, tag = 'output window, operand 0, single buffered']
    %8 = vsyncpa [#allocation4], 0
    %9 = vsyncpa [#allocation7], 0
    %10 = vsyncpa [#allocation5], 0
    // Predicated region
    $region2: #{tpu_custom_call.1} parent=1 // pred_check
      _
    $region3: #{tpu_custom_call.1} parent=1 // pred_check_branch
      %12 = sbr.rel (0) target = $region5
    $region4: #{tpu_custom_call.1} parent=1 // pred_region
      %s14 = ssub.s32 1024, 1024
      %15 = vsyncadd [#allocation4], %s14
      %s16 = sshll.u32 [#allocation3], 4
      %s17 = int_to_ptr.vmem [resolvable:$true] %s16
      %22 = dma.hbm_to_vmem [thread:$0]  %s0, 1024, %s17, [#allocation4], 64, 64, 4
    $region5: #{tpu_custom_call.1} parent=1 // pred_fallthru
      _
    // Predicated region
    $region6: #{tpu_custom_call.1} parent=1 // pred_check
      _
    $region7: #{tpu_custom_call.1} parent=1 // pred_check_branch
      %24 = sbr.rel (0) target = $region9
    $region8: #{tpu_custom_call.1} parent=1 // pred_region
      %s26 = ssub.s32 512, 512
      %27 = vsyncadd [#allocation7], %s26
      %s28 = sshll.u32 [#allocation6], 4
      %s29 = int_to_ptr.vmem [resolvable:$true] %s28
      %34 = dma.hbm_to_vmem [thread:$0]  %s1, 512, %s29, [#allocation7], 64, 64, 4
    $region9: #{tpu_custom_call.1} parent=1 // pred_fallthru
      _
    // Predicated region
    $region10: #{tpu_custom_call.1} parent=1 // pred_check
      _
    $region11: #{tpu_custom_call.1} parent=1 // pred_check_branch
      %36 = sbr.rel (0) target = $region13
    $region12: #{tpu_custom_call.1} parent=1 // pred_region
      %s38 = ssub.s32 128, 128
      %39 = vsyncadd [#allocation7], %s38
      %s41 = sshll.u32 [#allocation8], 4
      %s42 = int_to_ptr.vmem [resolvable:$true] %s41
      %44 = dma.hbm_to_vmem [thread:$0]  %s2, 128, %s42, [#allocation7]
    $region13: #{tpu_custom_call.1} parent=1 // pred_fallthru
      _
    // Predicated region
    $region14: #{tpu_custom_call.1} parent=1 // pred_check
      _
    $region15: #{tpu_custom_call.1} parent=1 // pred_check_branch
      %46 = sbr.rel (0) target = $region17
    $region16: #{tpu_custom_call.1} parent=1 // pred_region
      %47 = dma.done [#allocation4], 1024
    $region17: #{tpu_custom_call.1} parent=1 // pred_fallthru
      _
    // Predicated region
    $region18: #{tpu_custom_call.1} parent=1 // pred_check
      _
    $region19: #{tpu_custom_call.1} parent=1 // pred_check_branch
      %49 = sbr.rel (0) target = $region21
    $region20: #{tpu_custom_call.1} parent=1 // pred_region
      %50 = dma.done [#allocation7], 512
    $region21: #{tpu_custom_call.1} parent=1 // pred_fallthru
      _
    // Predicated region
    $region22: #{tpu_custom_call.1} parent=1 // pred_check
      _
    $region23: #{tpu_custom_call.1} parent=1 // pred_check_branch
      %52 = sbr.rel (0) target = $region25
    $region24: #{tpu_custom_call.1} parent=1 // pred_region
      %53 = dma.done [#allocation7], 128
    $region25: #{tpu_custom_call.1} parent=1 // pred_fallthru
      _
    %p55 = scmp.eq.s32.totalorder 0, 0
    // Predicated region
    $region26: #{tpu_custom_call.1} parent=1 // pred_check
      %p56 = pneg %p55
    $region27: #{tpu_custom_call.1} parent=1 // pred_check_branch
      %58 = sbr.rel (%p56) target = $region29
    $region28: #{tpu_custom_call.1} parent=1 // pred_region
      %59 = vst [vmem:[#allocation2] sm:$0xff] 0.0
    $region29: #{tpu_custom_call.1} parent=1 // pred_fallthru
      _
    %v60 = vld [vmem:[#allocation6] sm:$0xf]
    %v61 = vld [vmem:[#allocation6 + $0x4] sm:$0xf]
    %v62 = vld [vmem:[#allocation6 + $0x8] sm:$0xf]
    %v63 = vld [vmem:[#allocation6 + $0xc] sm:$0xf]
    %v64 = vld [vmem:[#allocation6 + $0x10] sm:$0xf]
    %v65 = vld [vmem:[#allocation6 + $0x14] sm:$0xf]
    %v66 = vld [vmem:[#allocation6 + $0x18] sm:$0xf]
    %v67 = vld [vmem:[#allocation6 + $0x1c] sm:$0xf]
    %v68 = vld [vmem:[#allocation3] sm:$0xf]
    %v69 = vld [vmem:[#allocation3 + $0x4] sm:$0xf]
    %v70 = vld [vmem:[#allocation3 + $0x8] sm:$0xf]
    %v71 = vld [vmem:[#allocation3 + $0xc] sm:$0xf]
    %v72 = vld [vmem:[#allocation3 + $0x10] sm:$0xf]
    %v73 = vld [vmem:[#allocation3 + $0x14] sm:$0xf]
    %v74 = vld [vmem:[#allocation3 + $0x18] sm:$0xf]
    %v75 = vld [vmem:[#allocation3 + $0x1c] sm:$0xf]
    %v76 = vld [vmem:[#allocation3 + $0x20] sm:$0xf]
    %v77 = vld [vmem:[#allocation3 + $0x24] sm:$0xf]
    %v78 = vld [vmem:[#allocation3 + $0x28] sm:$0xf]
    %v79 = vld [vmem:[#allocation3 + $0x2c] sm:$0xf]
    %v80 = vld [vmem:[#allocation3 + $0x30] sm:$0xf]
    %v81 = vld [vmem:[#allocation3 + $0x34] sm:$0xf]
    %v82 = vld [vmem:[#allocation3 + $0x38] sm:$0xf]
    %v83 = vld [vmem:[#allocation3 + $0x3c] sm:$0xf]
    %v92 = vunpack.c.l.b16 %v60
    %v93 = vunpack.c.l.b16 %v61
    %v94 = vunpack.c.l.b16 %v62
    %v95 = vunpack.c.l.b16 %v63
    %v96 = vunpack.c.l.b16 %v64
    %v97 = vunpack.c.l.b16 %v65
    %v98 = vunpack.c.l.b16 %v66
    %v99 = vunpack.c.l.b16 %v67
    %v100 = vpack.c.b16 %v93, %v92
    %v101 = vpack.c.b16 %v95, %v94
    %v102 = vpack.c.b16 %v97, %v96
    %v103 = vpack.c.b16 %v99, %v98
    %v124 = vunpack.c.l.b16 %v68
    %v125 = vunpack.c.l.b16 %v69
    %v126 = vunpack.c.l.b16 %v70
    %v127 = vunpack.c.l.b16 %v71
    %v128 = vunpack.c.l.b16 %v72
    %v129 = vunpack.c.l.b16 %v73
    %v130 = vunpack.c.l.b16 %v74
    %v131 = vunpack.c.l.b16 %v75
    %v132 = vunpack.c.l.b16 %v76
    %v133 = vunpack.c.l.b16 %v77
    %v134 = vunpack.c.l.b16 %v78
    %v135 = vunpack.c.l.b16 %v79
    %v136 = vunpack.c.l.b16 %v80
    %v137 = vunpack.c.l.b16 %v81
    %v138 = vunpack.c.l.b16 %v82
    %v139 = vunpack.c.l.b16 %v83
    %v140 = vpack.c.b16 %v125, %v124
    %v141 = vpack.c.b16 %v127, %v126
    %v142 = vpack.c.b16 %v129, %v128
    %v143 = vpack.c.b16 %v131, %v130
    %v144 = vpack.c.b16 %v133, %v132
    %v145 = vpack.c.b16 %v135, %v134
    %v146 = vpack.c.b16 %v137, %v136
    %v147 = vpack.c.b16 %v139, %v138
    %156 = vmatprep.subr.bf16.mxu0 0
    %157 = vmatpush1.bf16.xpose.msra.mxu0 %v147
    %158 = vmatprep.subr.bf16.mxu0 0
    %159 = vmatpush1.bf16.xpose.msra.mxu0 %v146
    %160 = vmatprep.subr.bf16.mxu0 0
    %161 = vmatpush1.bf16.xpose.msra.mxu0 %v145
    %162 = vmatprep.subr.bf16.mxu0 0
    %163 = vmatpush1.bf16.xpose.msra.mxu0 %v144
    %164 = vmatprep.subr.bf16.mxu0 0
    %165 = vmatpush1.bf16.xpose.msra.mxu0 %v143
    %166 = vmatprep.subr.bf16.mxu0 0
    %167 = vmatpush1.bf16.xpose.msra.mxu0 %v142
    %168 = vmatprep.subr.bf16.mxu0 0
    %169 = vmatpush1.bf16.xpose.msra.mxu0 %v141
    %170 = vmatprep.subr.bf16.mxu0 0
    %171 = vmatpush1.bf16.xpose.msra.mxu0 %v140
    %172 = vmatprep.subr.bf16.mxu0 0
    %173 = vmatpush2.bf16.xpose.msra.mxu0 0
    %174 = vmatprep.subr.bf16.mxu0 0
    %175 = vmatpush2.bf16.xpose.msra.mxu0 0
    %176 = vmatprep.subr.bf16.mxu0 0
    %177 = vmatpush2.bf16.xpose.msra.mxu0 0
    %178 = vmatprep.subr.bf16.mxu0 0
    %179 = vmatpush2.bf16.xpose.msra.mxu0 0
    %180 = vmatprep.subr.bf16.mxu0 0
    %181 = vmatpush2.bf16.xpose.msra.mxu0 0
    %182 = vmatprep.subr.bf16.mxu0 0
    %183 = vmatpush2.bf16.xpose.msra.mxu0 0
    %184 = vmatprep.subr.bf16.mxu0 0
    %185 = vmatpush2.bf16.xpose.msra.mxu0 0
    %186 = vmatprep.subr.bf16.mxu0 0
    %187 = vmatpush2.bf16.xpose.msra.mxu0 0
    %188 = vmatprep.mubr.bf16.mxu0 0
    %189 = vmatmul.mubr.bf16.gmra.mxu0 %v100
    %v190 = vpop.f32.mrf.mxu0
    %v191 = vadd.f32 0.0, %v190
    %v192 = vpop.f32.mrf.mxu0
    %v193 = vpop.f32.mrf.mxu0
    %v194 = vadd.f32 0.0, %v193
    %v195 = vpop.f32.mrf.mxu0
    %196 = vmatprep.mubr.bf16.mxu0 0
    %197 = vmatmul.mubr.bf16.gmra.mxu0 %v101
    %v198 = vpop.f32.mrf.mxu0
    %v199 = vadd.f32 0.0, %v198
    %v200 = vpop.f32.mrf.mxu0
    %v201 = vpop.f32.mrf.mxu0
    %v202 = vadd.f32 0.0, %v201
    %v203 = vpop.f32.mrf.mxu0
    %204 = vmatprep.mubr.bf16.mxu0 0
    %205 = vmatmul.mubr.bf16.gmra.mxu0 %v102
    %v206 = vpop.f32.mrf.mxu0
    %v207 = vadd.f32 0.0, %v206
    %v208 = vpop.f32.mrf.mxu0
    %v209 = vpop.f32.mrf.mxu0
    %v210 = vadd.f32 0.0, %v209
    %v211 = vpop.f32.mrf.mxu0
    %212 = vmatprep.mubr.bf16.mxu0 0
    %213 = vmatmul.mubr.bf16.gmra.mxu0 %v103
    %v214 = vpop.f32.mrf.mxu0
    %v215 = vadd.f32 0.0, %v214
    %v216 = vpop.f32.mrf.mxu0
    %v217 = vpop.f32.mrf.mxu0
    %v218 = vadd.f32 0.0, %v217
    %v219 = vpop.f32.mrf.mxu0
    %220 = vdwg.mxu0
    %v221 = vld [vmem:[#allocation8] sm:$0xff]
    %s222 = smul.u32 0, 64
    %v223 = vlaneseq
    %v224 = vshrl.u32 %v223, 7
    %v225 = vadd.s32 %v224, 8
    %v226 = vadd.s32 %v224, 16
    %v227 = vadd.s32 %v224, 24
    %v228 = vadd.s32 %v224, 32
    %v229 = vadd.s32 %v224, 40
    %v230 = vadd.s32 %v224, 48
    %v231 = vadd.s32 %v224, 56
    %v232 = vstv %s222
    %v233 = vadd.s32 %v232, %v224
    %v234 = vadd.s32 %v232, %v225
    %v235 = vadd.s32 %v232, %v226
    %v236 = vadd.s32 %v232, %v227
    %v237 = vadd.s32 %v232, %v228
    %v238 = vadd.s32 %v232, %v229
    %v239 = vadd.s32 %v232, %v230
    %v240 = vadd.s32 %v232, %v231
    %v241 = vlaneseq
    %v242 = vshrl.u32 %v241, 7
    %v243 = vsub.s32 0, %v242
    %v244 = vrot.slane %v221, %v243
    %vm245 = vcmp.eq.s32.totalorder %v233, %v244
    %vm246 = vcmp.eq.s32.totalorder %v234, %v244
    %vm247 = vcmp.eq.s32.totalorder %v235, %v244
    %vm248 = vcmp.eq.s32.totalorder %v236, %v244
    %vm249 = vcmp.eq.s32.totalorder %v237, %v244
    %vm250 = vcmp.eq.s32.totalorder %v238, %v244
    %vm251 = vcmp.eq.s32.totalorder %v239, %v244
    %vm252 = vcmp.eq.s32.totalorder %v240, %v244
    %v253 = vld [vmem:[#allocation2] sm:$0x1]
    %v254 = vsel %vm245, %v191, 0.0
    %v255 = vsel %vm246, %v194, 0.0
    %v256 = vsel %vm247, %v199, 0.0
    %v257 = vsel %vm248, %v202, 0.0
    %v258 = vsel %vm249, %v207, 0.0
    %v259 = vsel %vm250, %v210, 0.0
    %v260 = vsel %vm251, %v215, 0.0
    %v261 = vsel %vm252, %v218, 0.0
    %v262 = vadd.f32 %v254, %v255
    %v263 = vadd.f32 %v262, %v256
    %v264 = vadd.f32 %v263, %v257
    %v265 = vadd.f32 %v264, %v258
    %v266 = vadd.f32 %v265, %v259
    %v267 = vadd.f32 %v266, %v260
    %v268 = vadd.f32 %v267, %v261
    %v269 = vrot.slane %v268, 4
    %v270 = vadd.f32 %v268, %v269
    %v271 = vrot.slane %v270, 2
    %v272 = vadd.f32 %v270, %v271
    %v273 = vrot.slane %v272, 1
    %v274 = vadd.f32 %v272, %v273
    %v275 = vadd.f32 %v253, %v274
    %276 = vst [vmem:[#allocation2] sm:$0x1] %v275
    %v277 = vlaneseq
    %v278 = vshrl.u32 %v277, 7
    %v279 = vsub.s32 1, %v278
    %v280 = vrot.slane %v221, %v279
    %vm281 = vcmp.eq.s32.totalorder %v233, %v280
    %vm282 = vcmp.eq.s32.totalorder %v234, %v280
    %vm283 = vcmp.eq.s32.totalorder %v235, %v280
    %vm284 = vcmp.eq.s32.totalorder %v236, %v280
    %vm285 = vcmp.eq.s32.totalorder %v237, %v280
    %vm286 = vcmp.eq.s32.totalorder %v238, %v280
    %vm287 = vcmp.eq.s32.totalorder %v239, %v280
    %vm288 = vcmp.eq.s32.totalorder %v240, %v280
    %v289 = vld [vmem:[#allocation2 + $0x1] sm:$0x1]
    %v290 = vsel %vm281, %v191, 0.0
    %v291 = vsel %vm282, %v194, 0.0
    %v292 = vsel %vm283, %v199, 0.0
    %v293 = vsel %vm284, %v202, 0.0
    %v294 = vsel %vm285, %v207, 0.0
    %v295 = vsel %vm286, %v210, 0.0
    %v296 = vsel %vm287, %v215, 0.0
    %v297 = vsel %vm288, %v218, 0.0
    %v298 = vadd.f32 %v290, %v291
    %v299 = vadd.f32 %v298, %v292
    %v300 = vadd.f32 %v299, %v293
    %v301 = vadd.f32 %v300, %v294
    %v302 = vadd.f32 %v301, %v295
    %v303 = vadd.f32 %v302, %v296
    %v304 = vadd.f32 %v303, %v297
    %v305 = vrot.slane %v304, 4
    %v306 = vadd.f32 %v304, %v305
    %v307 = vrot.slane %v306, 2
    %v308 = vadd.f32 %v306, %v307
    %v309 = vrot.slane %v308, 1
    %v310 = vadd.f32 %v308, %v309
    %v311 = vadd.f32 %v289, %v310
    %312 = vst [vmem:[#allocation2 + $0x1] sm:$0x1] %v311
    %v313 = vlaneseq
    %v314 = vshrl.u32 %v313, 7
    %v315 = vsub.s32 2, %v314
    %v316 = vrot.slane %v221, %v315
    %vm317 = vcmp.eq.s32.totalorder %v233, %v316
    %vm318 = vcmp.eq.s32.totalorder %v234, %v316
    %vm319 = vcmp.eq.s32.totalorder %v235, %v316
    %vm320 = vcmp.eq.s32.totalorder %v236, %v316
    %vm321 = vcmp.eq.s32.totalorder %v237, %v316
    %vm322 = vcmp.eq.s32.totalorder %v238, %v316
    %vm323 = vcmp.eq.s32.totalorder %v239, %v316
    %vm324 = vcmp.eq.s32.totalorder %v240, %v316
    %v325 = vld [vmem:[#allocation2 + $0x2] sm:$0x1]
    %v326 = vsel %vm317, %v191, 0.0
    %v327 = vsel %vm318, %v194, 0.0
    %v328 = vsel %vm319, %v199, 0.0
    %v329 = vsel %vm320, %v202, 0.0
    %v330 = vsel %vm321, %v207, 0.0
    %v331 = vsel %vm322, %v210, 0.0
    %v332 = vsel %vm323, %v215, 0.0
    %v333 = vsel %vm324, %v218, 0.0
    %v334 = vadd.f32 %v326, %v327
    %v335 = vadd.f32 %v334, %v328
    %v336 = vadd.f32 %v335, %v329
    %v337 = vadd.f32 %v336, %v330
    %v338 = vadd.f32 %v337, %v331
    %v339 = vadd.f32 %v338, %v332
    %v340 = vadd.f32 %v339, %v333
    %v341 = vrot.slane %v340, 4
    %v342 = vadd.f32 %v340, %v341
    %v343 = vrot.slane %v342, 2
    %v344 = vadd.f32 %v342, %v343
    %v345 = vrot.slane %v344, 1
    %v346 = vadd.f32 %v344, %v345
    %v347 = vadd.f32 %v325, %v346
    %348 = vst [vmem:[#allocation2 + $0x2] sm:$0x1] %v347
    %v349 = vlaneseq
    %v350 = vshrl.u32 %v349, 7
    %v351 = vsub.s32 3, %v350
    %v352 = vrot.slane %v221, %v351
    %vm353 = vcmp.eq.s32.totalorder %v233, %v352
    %vm354 = vcmp.eq.s32.totalorder %v234, %v352
    %vm355 = vcmp.eq.s32.totalorder %v235, %v352
    %vm356 = vcmp.eq.s32.totalorder %v236, %v352
    %vm357 = vcmp.eq.s32.totalorder %v237, %v352
    %vm358 = vcmp.eq.s32.totalorder %v238, %v352
    %vm359 = vcmp.eq.s32.totalorder %v239, %v352
    %vm360 = vcmp.eq.s32.totalorder %v240, %v352
    %v361 = vld [vmem:[#allocation2 + $0x3] sm:$0x1]
    %v362 = vsel %vm353, %v191, 0.0
    %v363 = vsel %vm354, %v194, 0.0
    %v364 = vsel %vm355, %v199, 0.0
    %v365 = vsel %vm356, %v202, 0.0
    %v366 = vsel %vm357, %v207, 0.0
    %v367 = vsel %vm358, %v210, 0.0
    %v368 = vsel %vm359, %v215, 0.0
    %v369 = vsel %vm360, %v218, 0.0
    %v370 = vadd.f32 %v362, %v363
    %v371 = vadd.f32 %v370, %v364
    %v372 = vadd.f32 %v371, %v365
    %v373 = vadd.f32 %v372, %v366
    %v374 = vadd.f32 %v373, %v367
    %v375 = vadd.f32 %v374, %v368
    %v376 = vadd.f32 %v375, %v369
    %v377 = vrot.slane %v376, 4
    %v378 = vadd.f32 %v376, %v377
    %v379 = vrot.slane %v378, 2
    %v380 = vadd.f32 %v378, %v379
    %v381 = vrot.slane %v380, 1
    %v382 = vadd.f32 %v380, %v381
    %v383 = vadd.f32 %v361, %v382
    %384 = vst [vmem:[#allocation2 + $0x3] sm:$0x1] %v383
    %v385 = vlaneseq
    %v386 = vshrl.u32 %v385, 7
    %v387 = vsub.s32 4, %v386
    %v388 = vrot.slane %v221, %v387
    %vm389 = vcmp.eq.s32.totalorder %v233, %v388
    %vm390 = vcmp.eq.s32.totalorder %v234, %v388
    %vm391 = vcmp.eq.s32.totalorder %v235, %v388
    %vm392 = vcmp.eq.s32.totalorder %v236, %v388
    %vm393 = vcmp.eq.s32.totalorder %v237, %v388
    %vm394 = vcmp.eq.s32.totalorder %v238, %v388
    %vm395 = vcmp.eq.s32.totalorder %v239, %v388
    %vm396 = vcmp.eq.s32.totalorder %v240, %v388
    %v397 = vld [vmem:[#allocation2 + $0x4] sm:$0x1]
    %v398 = vsel %vm389, %v191, 0.0
    %v399 = vsel %vm390, %v194, 0.0
    %v400 = vsel %vm391, %v199, 0.0
    %v401 = vsel %vm392, %v202, 0.0
    %v402 = vsel %vm393, %v207, 0.0
    %v403 = vsel %vm394, %v210, 0.0
    %v404 = vsel %vm395, %v215, 0.0
    %v405 = vsel %vm396, %v218, 0.0
    %v406 = vadd.f32 %v398, %v399
    %v407 = vadd.f32 %v406, %v400
    %v408 = vadd.f32 %v407, %v401
    %v409 = vadd.f32 %v408, %v402
    %v410 = vadd.f32 %v409, %v403
    %v411 = vadd.f32 %v410, %v404
    %v412 = vadd.f32 %v411, %v405
    %v413 = vrot.slane %v412, 4
    %v414 = vadd.f32 %v412, %v413
    %v415 = vrot.slane %v414, 2
    %v416 = vadd.f32 %v414, %v415
    %v417 = vrot.slane %v416, 1
    %v418 = vadd.f32 %v416, %v417
    %v419 = vadd.f32 %v397, %v418
    %420 = vst [vmem:[#allocation2 + $0x4] sm:$0x1] %v419
    %v421 = vlaneseq
    %v422 = vshrl.u32 %v421, 7
    %v423 = vsub.s32 5, %v422
    %v424 = vrot.slane %v221, %v423
    %vm425 = vcmp.eq.s32.totalorder %v233, %v424
    %vm426 = vcmp.eq.s32.totalorder %v234, %v424
    %vm427 = vcmp.eq.s32.totalorder %v235, %v424
    %vm428 = vcmp.eq.s32.totalorder %v236, %v424
    %vm429 = vcmp.eq.s32.totalorder %v237, %v424
    %vm430 = vcmp.eq.s32.totalorder %v238, %v424
    %vm431 = vcmp.eq.s32.totalorder %v239, %v424
    %vm432 = vcmp.eq.s32.totalorder %v240, %v424
    %v433 = vld [vmem:[#allocation2 + $0x5] sm:$0x1]
    %v434 = vsel %vm425, %v191, 0.0
    %v435 = vsel %vm426, %v194, 0.0
    %v436 = vsel %vm427, %v199, 0.0
    %v437 = vsel %vm428, %v202, 0.0
    %v438 = vsel %vm429, %v207, 0.0
    %v439 = vsel %vm430, %v210, 0.0
    %v440 = vsel %vm431, %v215, 0.0
    %v441 = vsel %vm432, %v218, 0.0
    %v442 = vadd.f32 %v434, %v435
    %v443 = vadd.f32 %v442, %v436
    %v444 = vadd.f32 %v443, %v437
    %v445 = vadd.f32 %v444, %v438
    %v446 = vadd.f32 %v445, %v439
    %v447 = vadd.f32 %v446, %v440
    %v448 = vadd.f32 %v447, %v441
    %v449 = vrot.slane %v448, 4
    %v450 = vadd.f32 %v448, %v449
    %v451 = vrot.slane %v450, 2
    %v452 = vadd.f32 %v450, %v451
    %v453 = vrot.slane %v452, 1
    %v454 = vadd.f32 %v452, %v453
    %v455 = vadd.f32 %v433, %v454
    %456 = vst [vmem:[#allocation2 + $0x5] sm:$0x1] %v455
    %v457 = vlaneseq
    %v458 = vshrl.u32 %v457, 7
    %v459 = vsub.s32 6, %v458
    %v460 = vrot.slane %v221, %v459
    %vm461 = vcmp.eq.s32.totalorder %v233, %v460
    %vm462 = vcmp.eq.s32.totalorder %v234, %v460
    %vm463 = vcmp.eq.s32.totalorder %v235, %v460
    %vm464 = vcmp.eq.s32.totalorder %v236, %v460
    %vm465 = vcmp.eq.s32.totalorder %v237, %v460
    %vm466 = vcmp.eq.s32.totalorder %v238, %v460
    %vm467 = vcmp.eq.s32.totalorder %v239, %v460
    %vm468 = vcmp.eq.s32.totalorder %v240, %v460
    %v469 = vld [vmem:[#allocation2 + $0x6] sm:$0x1]
    %v470 = vsel %vm461, %v191, 0.0
    %v471 = vsel %vm462, %v194, 0.0
    %v472 = vsel %vm463, %v199, 0.0
    %v473 = vsel %vm464, %v202, 0.0
    %v474 = vsel %vm465, %v207, 0.0
    %v475 = vsel %vm466, %v210, 0.0
    %v476 = vsel %vm467, %v215, 0.0
    %v477 = vsel %vm468, %v218, 0.0
    %v478 = vadd.f32 %v470, %v471
    %v479 = vadd.f32 %v478, %v472
    %v480 = vadd.f32 %v479, %v473
    %v481 = vadd.f32 %v480, %v474
    %v482 = vadd.f32 %v481, %v475
    %v483 = vadd.f32 %v482, %v476
    %v484 = vadd.f32 %v483, %v477
    %v485 = vrot.slane %v484, 4
    %v486 = vadd.f32 %v484, %v485
    %v487 = vrot.slane %v486, 2
    %v488 = vadd.f32 %v486, %v487
    %v489 = vrot.slane %v488, 1
    %v490 = vadd.f32 %v488, %v489
    %v491 = vadd.f32 %v469, %v490
    %492 = vst [vmem:[#allocation2 + $0x6] sm:$0x1] %v491
    %v493 = vlaneseq
    %v494 = vshrl.u32 %v493, 7
    %v495 = vsub.s32 7, %v494
    %v496 = vrot.slane %v221, %v495
    %vm497 = vcmp.eq.s32.totalorder %v233, %v496
    %vm498 = vcmp.eq.s32.totalorder %v234, %v496
    %vm499 = vcmp.eq.s32.totalorder %v235, %v496
    %vm500 = vcmp.eq.s32.totalorder %v236, %v496
    %vm501 = vcmp.eq.s32.totalorder %v237, %v496
    %vm502 = vcmp.eq.s32.totalorder %v238, %v496
    %vm503 = vcmp.eq.s32.totalorder %v239, %v496
    %vm504 = vcmp.eq.s32.totalorder %v240, %v496
    %v505 = vld [vmem:[#allocation2 + $0x7] sm:$0x1]
    %v506 = vsel %vm497, %v191, 0.0
    %v507 = vsel %vm498, %v194, 0.0
    %v508 = vsel %vm499, %v199, 0.0
    %v509 = vsel %vm500, %v202, 0.0
    %v510 = vsel %vm501, %v207, 0.0
    %v511 = vsel %vm502, %v210, 0.0
    %v512 = vsel %vm503, %v215, 0.0
    %v513 = vsel %vm504, %v218, 0.0
    %v514 = vadd.f32 %v506, %v507
    %v515 = vadd.f32 %v514, %v508
    %v516 = vadd.f32 %v515, %v509
    %v517 = vadd.f32 %v516, %v510
    %v518 = vadd.f32 %v517, %v511
    %v519 = vadd.f32 %v518, %v512
    %v520 = vadd.f32 %v519, %v513
    %v521 = vrot.slane %v520, 4
    %v522 = vadd.f32 %v520, %v521
    %v523 = vrot.slane %v522, 2
    %v524 = vadd.f32 %v522, %v523
    %v525 = vrot.slane %v524, 1
    %v526 = vadd.f32 %v524, %v525
    %v527 = vadd.f32 %v505, %v526
    %528 = vst [vmem:[#allocation2 + $0x7] sm:$0x1] %v527
    // Predicated region
    $region30: #{tpu_custom_call.1} parent=1 // pred_check
      %p529 = pneg %p55
    $region31: #{tpu_custom_call.1} parent=1 // pred_check_branch
      %531 = sbr.rel (%p529) target = $region33
    $region32: #{tpu_custom_call.1} parent=1 // pred_region
      %v532 = vld [vmem:[#allocation2] sm:$0xff]
      %v533 = vmul.f32 %v532, 14.285714
      %v534 = vmul.f32 %v533, 1.442695
      %v535 = vpow.pop %v534
      %536 = vst [vmem:[#allocation9] sm:$0xff] %v535
    $region33: #{tpu_custom_call.1} parent=1 // pred_fallthru
      _
    // Predicated region
    $region34: #{tpu_custom_call.1} parent=1 // pred_check
      _
    $region35: #{tpu_custom_call.1} parent=1 // pred_check_branch
      %538 = sbr.rel (0) target = $region37
    $region36: #{tpu_custom_call.1} parent=1 // pred_region
      %s540 = ssub.s32 128, 128
      %541 = vsyncadd [#allocation5], %s540
      %s543 = sshll.u32 [#allocation9], 4
      %s544 = int_to_ptr.vmem [resolvable:$true] %s543
      %546 = dma.vmem_to_hbm [thread:$0]  %s544, 128, %s3, [#allocation5]
    $region37: #{tpu_custom_call.1} parent=1 // pred_fallthru
      _
    // Predicated region
    $region38: #{tpu_custom_call.1} parent=1 // pred_check
      _
    $region39: #{tpu_custom_call.1} parent=1 // pred_check_branch
      %548 = sbr.rel (0) target = $region41
    $region40: #{tpu_custom_call.1} parent=1 // pred_region
      %549 = dma.done [#allocation5], 128
    $region41: #{tpu_custom_call.1} parent=1 // pred_fallthru
      _
    %550 = vsyncpa [#allocation4], 1
    %551 = vsyncpa [#allocation7], 1
    %552 = vsyncpa [#allocation5], 1

</llo_original>
